<compile_context>
chip_gen: v5e
topology: v5e:2x2
jax: 0.10.0
libtpu: 0.0.40
codegen_flags: <defaults>
</compile_context>

<pallas_src>
import functools

import numpy as np
import jax
import jax.numpy as jnp
from jax import lax
from jax.experimental import pallas as pl
from jax.experimental.pallas import tpu as pltpu


# ----------------------------------------------------------------- fast path ("same" frame)
def _sepconv_same_kernel(x_ref, mw_ref, pw_ref, o_ref, xpf_ref, *,
                         H, W, KH, KW, pad_h, pad_w, lpad):
    """Fused depthwise + pointwise conv for one image, stride=1 / "same" spatial frame.

    x_ref  : (1, Cin, H*W)          flat input image (lane-dense)
    mw_ref : (KH*KW, Cin, H*W)      per-tap (depthwise weight * boundary mask)
    pw_ref : (Cout, Cin)            pointwise weights
    o_ref  : (1, Cout, H*W)         flat output (lane-dense, already NCHW order)
    xpf_ref: (Cin, lpad+H*W+rpad)   VMEM scratch: zero-padded flat image
    """
    HW = H * W
    cin = x_ref.shape[1]

    # Zero-padded flat copy of the image (padding handled in-kernel, not by an XLA pad op).
    xpf_ref[...] = jnp.zeros_like(xpf_ref)
    xpf_ref[:, lpad:lpad + HW] = x_ref[0].astype(jnp.float32)   # lpad is a lane multiple

    # Depthwise conv: each tap is a uniform lane shift of the flat image; out-of-image
    # reads are zeroed by the mask that was folded into mw_ref on the host.
    acc = jnp.zeros((cin, HW), jnp.float32)
    t = 0
    for kh in range(KH):
        for kw in range(KW):
            shift = (kh - pad_h) * W + (kw - pad_w)
            win = xpf_ref[:, lpad + shift:lpad + shift + HW]    # (Cin, HW)
            acc = acc + win * mw_ref[t]
            t += 1

    # Pointwise 1x1 conv == (Cout, Cin) @ (Cin, HW) on the MXU; result is lane-dense and
    # already laid out as (Cout, H*W) -> unmasked vst + direct NCHW writeback.
    out = jnp.dot(pw_ref[...].astype(jnp.float32), acc,
                  preferred_element_type=jnp.float32)           # (Cout, HW)
    o_ref[0] = out.astype(o_ref.dtype)


# ----------------------------------------------------- general fallback (strided / "valid")
def _sepconv_nhwc_kernel(x_ref, dw_ref, pw_ref, o_ref, *, KH, KW, Ho, Wo, sh, sw):
    """Previous (validated) NHWC kernel, used only for stride != 1 or non-"same" padding."""
    x = x_ref[0]                                   # (Hp, Wp, Cin)
    cin = x.shape[-1]
    dw_acc = jnp.zeros((Ho, Wo, cin), jnp.float32)
    for kh in range(KH):
        for kw in range(KW):
            win = x[kh:kh + (Ho - 1) * sh + 1:sh,
                    kw:kw + (Wo - 1) * sw + 1:sw, :]            # (Ho, Wo, Cin)
            w = dw_ref[kh, kw, :].astype(jnp.float32)
            dw_acc = dw_acc + win.astype(jnp.float32) * w
    out = jnp.einsum("hwc,co->hwo", dw_acc, pw_ref[...].astype(jnp.float32),
                     preferred_element_type=jnp.float32)
    o_ref[0] = out.astype(o_ref.dtype)


def separable_conv2d(x_nchw, dw_weight, pw_weight, *, stride=1, padding=0):
    """x_nchw: (N, Cin, H, W); dw_weight: (Cin,1,KH,KW); pw_weight: (Cout,Cin,1,1)."""
    N, Cin, H, W = x_nchw.shape
    KH, KW = int(dw_weight.shape[2]), int(dw_weight.shape[3])
    Cout = pw_weight.shape[0]
    sh = sw = int(stride)
    pad_h = pad_w = int(padding)

    Ho = (H + 2 * pad_h - KH) // sh + 1
    Wo = (W + 2 * pad_w - KW) // sw + 1

    pw_k = pw_weight.reshape(Cout, Cin)                          # (Cout, Cin)

    same_frame = (sh == 1 and sw == 1 and Ho == H and Wo == W)
    if same_frame:
        HW = H * W
        # Scratch halo sizes, rounded up to lane multiples so the interior copy is aligned.
        need_l = pad_h * W + pad_w
        need_r = (KH - 1 - pad_h) * W + (KW - 1 - pad_w)
        lpad = ((need_l + 127) // 128) * 128
        rpad = ((need_r + 127) // 128) * 128

        # Fold depthwise weights and boundary-validity masks into one per-tap multiplier
        # (host-side numpy -> tiny constant; removes vector int div/mod from the kernel).
        mask = np.zeros((KH * KW, H, W), np.float32)
        t = 0
        for kh in range(KH):
            for kw in range(KW):
                dh, dwc = kh - pad_h, kw - pad_w
                mask[t, max(0, -dh):min(H, H - dh), max(0, -dwc):min(W, W - dwc)] = 1.0
                t += 1
        mask = jnp.asarray(mask.reshape(KH * KW, 1, HW))                       # (T, 1, HW)
        dw_flat = jnp.transpose(dw_weight.reshape(Cin, KH * KW))[:, :, None]   # (T, Cin, 1)
        mw = dw_flat.astype(jnp.float32) * mask                                # (T, Cin, HW)

        x_flat = x_nchw.reshape(N, Cin, HW)            # free trailing-dim merge (no copy)

        kernel = functools.partial(_sepconv_same_kernel, H=H, W=W, KH=KH, KW=KW,
                                   pad_h=pad_h, pad_w=pad_w, lpad=lpad)
        out_flat = pl.pallas_call(
            kernel,
            out_shape=jax.ShapeDtypeStruct((N, Cout, HW), x_nchw.dtype),
            grid=(N,),
            in_specs=[
                pl.BlockSpec((1, Cin, HW), lambda n: (n, 0, 0)),
                pl.BlockSpec((KH * KW, Cin, HW), lambda n: (0, 0, 0)),
                pl.BlockSpec((Cout, Cin), lambda n: (0, 0)),
            ],
            out_specs=pl.BlockSpec((1, Cout, HW), lambda n: (n, 0, 0)),
            scratch_shapes=[pltpu.VMEM((Cin, lpad + HW + rpad), jnp.float32)],
            compiler_params=pltpu.CompilerParams(
                dimension_semantics=("parallel",)),
        )(x_flat, mw, pw_k)
        return out_flat.reshape(N, Cout, Ho, Wo)       # free trailing-dim split (no copy)

    # ---------------- general fallback: NHWC layout (stride != 1 or non-"same" padding) ---
    x = jnp.transpose(x_nchw, (0, 2, 3, 1))
    x = jnp.pad(x, ((0, 0), (pad_h, pad_h), (pad_w, pad_w), (0, 0)))
    Hp, Wp = H + 2 * pad_h, W + 2 * pad_w
    dw_k = jnp.transpose(dw_weight[:, 0, :, :], (1, 2, 0))       # (KH, KW, Cin)
    kernel = functools.partial(_sepconv_nhwc_kernel,
                               KH=KH, KW=KW, Ho=Ho, Wo=Wo, sh=sh, sw=sw)
    out_nhwc = pl.pallas_call(
        kernel,
        out_shape=jax.ShapeDtypeStruct((N, Ho, Wo, Cout), x_nchw.dtype),
        grid=(N,),
        in_specs=[
            pl.BlockSpec((1, Hp, Wp, Cin), lambda n: (n, 0, 0, 0)),
            pl.BlockSpec((KH, KW, Cin), lambda n: (0, 0, 0)),
            pl.BlockSpec((Cin, Cout), lambda n: (0, 0)),
        ],
        out_specs=pl.BlockSpec((1, Ho, Wo, Cout), lambda n: (n, 0, 0, 0)),
        compiler_params=pltpu.CompilerParams(dimension_semantics=("parallel",)),
    )(x, dw_k, jnp.transpose(pw_k))
    return jnp.transpose(out_nhwc, (0, 3, 1, 2))


def _reference(x_nchw, dw_weight, pw_weight, *, stride=1, padding=0):
    """Pure-JAX reference matching torch Conv2d semantics (bias=False)."""
    Cin = x_nchw.shape[1]
    dn = ("NCHW", "OIHW", "NCHW")
    y = lax.conv_general_dilated(
        x_nchw, dw_weight, window_strides=(stride, stride),
        padding=[(padding, padding), (padding, padding)],
        feature_group_count=Cin, dimension_numbers=dn)
    y = lax.conv_general_dilated(
        y, pw_weight, window_strides=(1, 1), padding=[(0, 0), (0, 0)],
        dimension_numbers=dn)
    return y


if __name__ == "__main__":
    # SeparableConv2d(in_channels=4, out_channels=8, kernel_size=(3,3),
    #                 stride=1, padding=1, bias=False)
    N, Cin, H, W = 2, 4, 16, 16
    Cout, KH, KW = 8, 3, 3
    stride, padding = 1, 1

    key = jax.random.PRNGKey(0)
    kx, kdw, kpw = jax.random.split(key, 3)
    x = jax.random.normal(kx, (N, Cin, H, W), dtype=jnp.float32)
    # PyTorch-shaped weights, deterministic init.
    dw_weight = 0.1 * jax.random.normal(kdw, (Cin, 1, KH, KW), dtype=jnp.float32)
    pw_weight = 0.1 * jax.random.normal(kpw, (Cout, Cin, 1, 1), dtype=jnp.float32)

    out = separable_conv2d(x, dw_weight, pw_weight, stride=stride, padding=padding)
    out = jax.block_until_ready(out)

    ref = _reference(x, dw_weight, pw_weight, stride=stride, padding=padding)
    assert out.shape == ref.shape, (out.shape, ref.shape)
    assert jnp.allclose(out, ref, atol=1e-4, rtol=1e-4), "mismatch vs reference conv"

    print("KERNEL_OK")
</pallas_src>

<mosaic_0001>
module attributes {stable_mosaic.version = 11 : i64} {
  func.func @_sepconv_same_kernel(%arg0: i32, %arg1: memref<1x4x256xf32, #tpu.memory_space<vmem>>, %arg2: memref<9x4x256xf32, #tpu.memory_space<vmem>>, %arg3: memref<8x4xf32, #tpu.memory_space<vmem>>, %arg4: memref<1x8x256xf32, #tpu.memory_space<vmem>>, %arg5: memref<4x512xf32, #tpu.memory_space<vmem>>) attributes {dimension_semantics = [#tpu.dimension_semantics<parallel>], iteration_bounds = array<i64: 2>, scalar_prefetch = 0 : i64, scratch_operands = 1 : i64, tpu.core_type = #tpu.core_type<tc>, window_params = [{transform_indices = @transform_0, window_bounds = array<i64: 1, 4, 256>}, {pipeline_mode = #tpu.pipeline_mode<synchronous>, transform_indices = @transform_1, window_bounds = array<i64: 9, 4, 256>}, {pipeline_mode = #tpu.pipeline_mode<synchronous>, transform_indices = @transform_2, window_bounds = array<i64: 8, 4>}, {transform_indices = @transform_3, window_bounds = array<i64: 1, 8, 256>}]} {
    %cst = arith.constant 0.000000e+00 : f32
    %0 = vector.broadcast %cst : f32 to vector<4x512xf32>
    %c0 = arith.constant 0 : index
    %c0_0 = arith.constant 0 : index
    %1 = vector.load %arg5[%c0, %c0_0] : memref<4x512xf32, #tpu.memory_space<vmem>>, vector<4x512xf32>
    tpu.vector_store %arg5[%c0, %c0_0], %0 {strides = array<i32>} : memref<4x512xf32, #tpu.memory_space<vmem>>, vector<4x512xf32>,
    %c0_1 = arith.constant 0 : index
    %c0_2 = arith.constant 0 : index
    %c0_3 = arith.constant 0 : index
    %2 = vector.load %arg1[%c0_1, %c0_2, %c0_3] : memref<1x4x256xf32, #tpu.memory_space<vmem>>, vector<1x4x256xf32>
    %3 = vector.shape_cast %2 : vector<1x4x256xf32> to vector<4x256xf32>
    %c0_4 = arith.constant 0 : index
    %c128 = arith.constant 128 : index
    %4 = vector.load %arg5[%c0_4, %c128] : memref<4x512xf32, #tpu.memory_space<vmem>>, vector<4x256xf32>
    tpu.vector_store %arg5[%c0_4, %c128], %3 {strides = array<i32>} : memref<4x512xf32, #tpu.memory_space<vmem>>, vector<4x256xf32>,
    %cst_5 = arith.constant 0.000000e+00 : f32
    %5 = vector.broadcast %cst_5 : f32 to vector<4x256xf32>
    %c0_6 = arith.constant 0 : index
    %c111 = arith.constant 111 : index
    %6 = vector.load %arg5[%c0_6, %c111] : memref<4x512xf32, #tpu.memory_space<vmem>>, vector<4x256xf32>
    %c0_7 = arith.constant 0 : index
    %c0_8 = arith.constant 0 : index
    %c0_9 = arith.constant 0 : index
    %7 = vector.load %arg2[%c0_7, %c0_8, %c0_9] : memref<9x4x256xf32, #tpu.memory_space<vmem>>, vector<1x4x256xf32>
    %8 = vector.shape_cast %7 : vector<1x4x256xf32> to vector<4x256xf32>
    %9 = arith.mulf %6, %8 : vector<4x256xf32>
    %10 = arith.addf %5, %9 : vector<4x256xf32>
    %c0_10 = arith.constant 0 : index
    %c112 = arith.constant 112 : index
    %11 = vector.load %arg5[%c0_10, %c112] : memref<4x512xf32, #tpu.memory_space<vmem>>, vector<4x256xf32>
    %c1 = arith.constant 1 : index
    %c0_11 = arith.constant 0 : index
    %c0_12 = arith.constant 0 : index
    %12 = vector.load %arg2[%c1, %c0_11, %c0_12] : memref<9x4x256xf32, #tpu.memory_space<vmem>>, vector<1x4x256xf32>
    %13 = vector.shape_cast %12 : vector<1x4x256xf32> to vector<4x256xf32>
    %14 = arith.mulf %11, %13 : vector<4x256xf32>
    %15 = arith.addf %10, %14 : vector<4x256xf32>
    %c0_13 = arith.constant 0 : index
    %c113 = arith.constant 113 : index
    %16 = vector.load %arg5[%c0_13, %c113] : memref<4x512xf32, #tpu.memory_space<vmem>>, vector<4x256xf32>
    %c2 = arith.constant 2 : index
    %c0_14 = arith.constant 0 : index
    %c0_15 = arith.constant 0 : index
    %17 = vector.load %arg2[%c2, %c0_14, %c0_15] : memref<9x4x256xf32, #tpu.memory_space<vmem>>, vector<1x4x256xf32>
    %18 = vector.shape_cast %17 : vector<1x4x256xf32> to vector<4x256xf32>
    %19 = arith.mulf %16, %18 : vector<4x256xf32>
    %20 = arith.addf %15, %19 : vector<4x256xf32>
    %c0_16 = arith.constant 0 : index
    %c127 = arith.constant 127 : index
    %21 = vector.load %arg5[%c0_16, %c127] : memref<4x512xf32, #tpu.memory_space<vmem>>, vector<4x256xf32>
    %c3 = arith.constant 3 : index
    %c0_17 = arith.constant 0 : index
    %c0_18 = arith.constant 0 : index
    %22 = vector.load %arg2[%c3, %c0_17, %c0_18] : memref<9x4x256xf32, #tpu.memory_space<vmem>>, vector<1x4x256xf32>
    %23 = vector.shape_cast %22 : vector<1x4x256xf32> to vector<4x256xf32>
    %24 = arith.mulf %21, %23 : vector<4x256xf32>
    %25 = arith.addf %20, %24 : vector<4x256xf32>
    %c0_19 = arith.constant 0 : index
    %c128_20 = arith.constant 128 : index
    %26 = vector.load %arg5[%c0_19, %c128_20] : memref<4x512xf32, #tpu.memory_space<vmem>>, vector<4x256xf32>
    %c4 = arith.constant 4 : index
    %c0_21 = arith.constant 0 : index
    %c0_22 = arith.constant 0 : index
    %27 = vector.load %arg2[%c4, %c0_21, %c0_22] : memref<9x4x256xf32, #tpu.memory_space<vmem>>, vector<1x4x256xf32>
    %28 = vector.shape_cast %27 : vector<1x4x256xf32> to vector<4x256xf32>
    %29 = arith.mulf %26, %28 : vector<4x256xf32>
    %30 = arith.addf %25, %29 : vector<4x256xf32>
    %c0_23 = arith.constant 0 : index
    %c129 = arith.constant 129 : index
    %31 = vector.load %arg5[%c0_23, %c129] : memref<4x512xf32, #tpu.memory_space<vmem>>, vector<4x256xf32>
    %c5 = arith.constant 5 : index
    %c0_24 = arith.constant 0 : index
    %c0_25 = arith.constant 0 : index
    %32 = vector.load %arg2[%c5, %c0_24, %c0_25] : memref<9x4x256xf32, #tpu.memory_space<vmem>>, vector<1x4x256xf32>
    %33 = vector.shape_cast %32 : vector<1x4x256xf32> to vector<4x256xf32>
    %34 = arith.mulf %31, %33 : vector<4x256xf32>
    %35 = arith.addf %30, %34 : vector<4x256xf32>
    %c0_26 = arith.constant 0 : index
    %c143 = arith.constant 143 : index
    %36 = vector.load %arg5[%c0_26, %c143] : memref<4x512xf32, #tpu.memory_space<vmem>>, vector<4x256xf32>
    %c6 = arith.constant 6 : index
    %c0_27 = arith.constant 0 : index
    %c0_28 = arith.constant 0 : index
    %37 = vector.load %arg2[%c6, %c0_27, %c0_28] : memref<9x4x256xf32, #tpu.memory_space<vmem>>, vector<1x4x256xf32>
    %38 = vector.shape_cast %37 : vector<1x4x256xf32> to vector<4x256xf32>
    %39 = arith.mulf %36, %38 : vector<4x256xf32>
    %40 = arith.addf %35, %39 : vector<4x256xf32>
    %c0_29 = arith.constant 0 : index
    %c144 = arith.constant 144 : index
    %41 = vector.load %arg5[%c0_29, %c144] : memref<4x512xf32, #tpu.memory_space<vmem>>, vector<4x256xf32>
    %c7 = arith.constant 7 : index
    %c0_30 = arith.constant 0 : index
    %c0_31 = arith.constant 0 : index
    %42 = vector.load %arg2[%c7, %c0_30, %c0_31] : memref<9x4x256xf32, #tpu.memory_space<vmem>>, vector<1x4x256xf32>
    %43 = vector.shape_cast %42 : vector<1x4x256xf32> to vector<4x256xf32>
    %44 = arith.mulf %41, %43 : vector<4x256xf32>
    %45 = arith.addf %40, %44 : vector<4x256xf32>
    %c0_32 = arith.constant 0 : index
    %c145 = arith.constant 145 : index
    %46 = vector.load %arg5[%c0_32, %c145] : memref<4x512xf32, #tpu.memory_space<vmem>>, vector<4x256xf32>
    %c8 = arith.constant 8 : index
    %c0_33 = arith.constant 0 : index
    %c0_34 = arith.constant 0 : index
    %47 = vector.load %arg2[%c8, %c0_33, %c0_34] : memref<9x4x256xf32, #tpu.memory_space<vmem>>, vector<1x4x256xf32>
    %48 = vector.shape_cast %47 : vector<1x4x256xf32> to vector<4x256xf32>
    %49 = arith.mulf %46, %48 : vector<4x256xf32>
    %50 = arith.addf %45, %49 : vector<4x256xf32>
    %c0_35 = arith.constant 0 : index
    %c0_36 = arith.constant 0 : index
    %51 = vector.load %arg3[%c0_35, %c0_36] : memref<8x4xf32, #tpu.memory_space<vmem>>, vector<8x4xf32>
    %cst_37 = arith.constant dense<0.000000e+00> : vector<8x256xf32>
    %52 = tpu.matmul %51, %50, %cst_37 {dimension_numbers = #tpu.dot_dimension_numbers<[1], [0], [0], [1], [0, 0, 1, 1], [], []>} : vector<8x4xf32>, vector<4x256xf32>, vector<8x256xf32> -> vector<8x256xf32>
    %c0_38 = arith.constant 0 : index
    %c0_39 = arith.constant 0 : index
    %c0_40 = arith.constant 0 : index
    %53 = vector.load %arg4[%c0_38, %c0_39, %c0_40] : memref<1x8x256xf32, #tpu.memory_space<vmem>>, vector<1x8x256xf32>
    %54 = vector.shape_cast %53 : vector<1x8x256xf32> to vector<8x256xf32>
    %55 = vector.shape_cast %52 : vector<8x256xf32> to vector<1x8x256xf32>
    tpu.vector_store %arg4[%c0_38, %c0_39, %c0_40], %55 {strides = array<i32>} : memref<1x8x256xf32, #tpu.memory_space<vmem>>, vector<1x8x256xf32>,
    return
  }
  func.func @transform_0(%arg0: i32) -> (i32, i32, i32) {
    %c0_i32 = arith.constant 0 : i32
    %c0_i32_0 = arith.constant 0 : i32
    %c0_i32_1 = arith.constant 0 : i32
    return %arg0, %c0_i32, %c0_i32_0 : i32, i32, i32
  }
  func.func @transform_1(%arg0: i32) -> (i32, i32, i32) {
    %c0_i32 = arith.constant 0 : i32
    %c0_i32_0 = arith.constant 0 : i32
    %c0_i32_1 = arith.constant 0 : i32
    %c0_i32_2 = arith.constant 0 : i32
    return %c0_i32, %c0_i32_0, %c0_i32_1 : i32, i32, i32
  }
  func.func @transform_2(%arg0: i32) -> (i32, i32) {
    %c0_i32 = arith.constant 0 : i32
    %c0_i32_0 = arith.constant 0 : i32
    %c0_i32_1 = arith.constant 0 : i32
    return %c0_i32, %c0_i32_0 : i32, i32
  }
  func.func @transform_3(%arg0: i32) -> (i32, i32, i32) {
    %c0_i32 = arith.constant 0 : i32
    %c0_i32_0 = arith.constant 0 : i32
    %c0_i32_1 = arith.constant 0 : i32
    return %arg0, %c0_i32, %c0_i32_0 : i32, i32, i32
  }
}

</mosaic_0001>

<llo_original>
// kernel: tpu_custom_call.1
$region0: #{tpu_custom_call.1}
  #allocation0 [shape = 'u32[]', space=smem, size = 0x4, offset = 0x4, fixed_abs, tag = 'smem constant byte address 0x4 - core index']
  #allocation1 [shape = 'u32[72,128]{1,0:T(1,128)}', space=vmem, size = 0x9000, scoped, tag = 'internal scratch']
  #allocation2 [shape = 'f32[4,512]{1,0:T(4,128)}', space=vmem, size = 0x2000, scoped, tag = 'scratch operand']
  %s0 = inlined_call_operand.hbm [shape: f32[2,4,256], index: 0, kind: input, shape index: {}]
  %s1 = inlined_call_operand.hbm [shape: f32[9,4,256], index: 1, kind: input, shape index: {}]
  %s2 = inlined_call_operand.vmem [shape: f32[8,4], index: 2, kind: input, shape index: {}]
  %s3 = inlined_call_operand.hbm [shape: f32[2,8,256], index: 3, kind: output, shape index: {}]
  %s4 = sld [smem:[#allocation0]]
  $region53: #{tpu_custom_call.1} parent=0
    _
  %s6 = ssub.s32 1, %s4
  %s7 = scalar_select 0, %s6, %s4
  $region1: #{tpu_custom_call.1} parent=0
    #allocation3 [shape = 'u8[8192]{0}', space=vmem, size = 0x2000, scoped, tag = 'input window, operand 0']
    #allocation4 [shape = 's32[2]{0}', space=sflag, size = 0x8, scoped, tag = 'scoped memory for tpu_custom_call.1']
    #allocation5 [shape = 's32[2]{0}', space=sflag, size = 0x8, scoped, tag = 'scoped memory for tpu_custom_call.1']
    #allocation6 [shape = 'u8[36864]{0}', space=vmem, size = 0x9000, scoped, tag = 'input window, operand 1, single buffered']
    #allocation7 [shape = 's32[1]{0}', space=sflag, size = 0x4, scoped, tag = 'scoped memory for tpu_custom_call.1']
    #allocation8 [shape = 'u8[16384]{0}', space=vmem, size = 0x4000, scoped, tag = 'output window, operand 0']
    %8 = vsyncpa [#allocation4], 0
    %s9 = scalar_lea.sflag [#allocation4], 1
    %10 = vsyncpa %s9, 0
    %11 = vsyncpa [#allocation7], 0
    %12 = vsyncpa [#allocation5], 0
    %s13 = scalar_lea.sflag [#allocation5], 1
    %14 = vsyncpa %s13, 0
    loop: start=0, step=1, limit=4
    $region2: #{tpu_custom_call.1} parent=1 // loop_pre_header
      _
    $region3: #{tpu_custom_call.1} parent=1 // loop_header
      %s16 = sphi 0, %s20
      %p17 = scmp.ge.s32.totalorder %s16, 4
      %s26 = sphi 0, %s28
      %s29 = sphi 0, %s26
      %s30 = sphi 0, %s29
      %s46 = sphi 0, %s30
      %s50 = sphi 0, %s50
      %s52 = sphi 0, %s50
      %s53 = sphi 0, %s52
      %s67 = sphi 0, %s53
      %s71 = sphi 0, %s71
      %s73 = sphi 0, %s71
      %s74 = sphi 0, %s73
      %s88 = sphi 0, %s74
      %s94 = sphi 0, %s96
      %s97 = sphi 0, %s94
      %s98 = sphi 0, %s97
      %s114 = sphi 0, %s98
    $region4: #{tpu_custom_call.1} parent=1 // loop_header_branch
      %19 = sbr.rel (%p17) target = $region8
    $region5: #{tpu_custom_call.1} parent=1 // loop_body
      %s21 = ssub.s32 %s16, 1
      %s22 = ssub.s32 %s16, 2
      %s23 = sadd.s32 %s16, 1
      %s24 = ssub.s32 %s16, %s23
      %p25 = scmp.eq.s32.totalorder %s24, 0
      %s27 = sadd.s32 %s26, 1
      %s28 = scalar_select %p25, %s26, %s27
      %p31 = pneg %p25
      %p32 = scmp.eq.s32.totalorder %s16, 1
      %p33 = por %p31, %p32
      %p34 = scmp.ne.s32.totalorder %s26, %s29
      %p35 = scmp.eq.s32.totalorder %s16, 0
      %p36 = por %p34, %p35
      %p37 = scmp.ne.s32.totalorder %s26, %s29
      %p38 = scmp.eq.s32.totalorder %s21, 1
      %p39 = por %p37, %p38
      %p40 = scmp.ne.s32.totalorder %s29, %s30
      %p41 = scmp.eq.s32.totalorder %s21, 0
      %p42 = por %p40, %p41
      %p43 = scmp.ne.s32.totalorder %s29, %s30
      %p44 = scmp.eq.s32.totalorder %s22, 1
      %p45 = por %p43, %p44
      %p47 = scmp.ne.s32.totalorder %s30, %s46
      %p48 = scmp.eq.s32.totalorder %s22, 0
      %p49 = por %p47, %p48
      %s51 = sadd.s32 %s50, 1
      %p54 = scmp.eq.s32.totalorder %s16, 1
      %p55 = scmp.ne.s32.totalorder %s50, %s52
      %p56 = scmp.eq.s32.totalorder %s16, 0
      %p57 = por %p55, %p56
      %p58 = scmp.ne.s32.totalorder %s50, %s52
      %p59 = scmp.eq.s32.totalorder %s21, 1
      %p60 = por %p58, %p59
      %p61 = scmp.ne.s32.totalorder %s52, %s53
      %p62 = scmp.eq.s32.totalorder %s21, 0
      %p63 = por %p61, %p62
      %p64 = scmp.ne.s32.totalorder %s52, %s53
      %p65 = scmp.eq.s32.totalorder %s22, 1
      %p66 = por %p64, %p65
      %p68 = scmp.ne.s32.totalorder %s53, %s67
      %p69 = scmp.eq.s32.totalorder %s22, 0
      %p70 = por %p68, %p69
      %s72 = sadd.s32 %s71, 1
      %p75 = scmp.eq.s32.totalorder %s16, 1
      %p76 = scmp.ne.s32.totalorder %s71, %s73
      %p77 = scmp.eq.s32.totalorder %s16, 0
      %p78 = por %p76, %p77
      %p79 = scmp.ne.s32.totalorder %s71, %s73
      %p80 = scmp.eq.s32.totalorder %s21, 1
      %p81 = por %p79, %p80
      %p82 = scmp.ne.s32.totalorder %s73, %s74
      %p83 = scmp.eq.s32.totalorder %s21, 0
      %p84 = por %p82, %p83
      %p85 = scmp.ne.s32.totalorder %s73, %s74
      %p86 = scmp.eq.s32.totalorder %s22, 1
      %p87 = por %p85, %p86
      %p89 = scmp.ne.s32.totalorder %s74, %s88
      %p90 = scmp.eq.s32.totalorder %s22, 0
      %p91 = por %p89, %p90
      %s92 = ssub.s32 %s16, %s23
      %p93 = scmp.eq.s32.totalorder %s92, 0
      %s95 = sadd.s32 %s94, 1
      %s96 = scalar_select %p93, %s94, %s95
      %p99 = pneg %p93
      %p100 = scmp.eq.s32.totalorder %s16, 1
      %p101 = por %p99, %p100
      %p102 = scmp.ne.s32.totalorder %s94, %s97
      %p103 = scmp.eq.s32.totalorder %s16, 0
      %p104 = por %p102, %p103
      %p105 = scmp.ne.s32.totalorder %s94, %s97
      %p106 = scmp.eq.s32.totalorder %s21, 1
      %p107 = por %p105, %p106
      %p108 = scmp.ne.s32.totalorder %s97, %s98
      %p109 = scmp.eq.s32.totalorder %s21, 0
      %p110 = por %p108, %p109
      %p111 = scmp.ne.s32.totalorder %s97, %s98
      %p112 = scmp.eq.s32.totalorder %s22, 1
      %p113 = por %p111, %p112
      %p115 = scmp.ne.s32.totalorder %s98, %s114
      %p116 = scmp.eq.s32.totalorder %s22, 0
      %p117 = por %p115, %p116
      %p118 = scmp.le.s32.totalorder 1, %s16
      %p119 = scmp.lt.s32.totalorder %s16, 3
      %p120 = pnand %p118, %p119
      %p121 = pneg %p120
      // Predicated region
      $region9: #{tpu_custom_call.1} parent=5 // pred_check
        _
      $region10: #{tpu_custom_call.1} parent=5 // pred_check_branch
        %123 = sbr.rel (%p120) target = $region12
      $region11: #{tpu_custom_call.1} parent=5 // pred_region
        %s124 = ssub.s32 %s16, 1
        // Predicated region
        $region13: #{tpu_custom_call.1} parent=11 // pred_check
          %p125 = pneg %p63
        $region14: #{tpu_custom_call.1} parent=11 // pred_check_branch
          %127 = sbr.rel (%p125) target = $region16
        $region15: #{tpu_custom_call.1} parent=11 // pred_region
          %129 = vsyncadd [#allocation7], 0
          %s130 = sshll.u32 %s1, 4
          %s131 = int_to_ptr.hbm [resolvable:$true] %s130
          %s132 = sshll.u32 [#allocation6], 4
          %s133 = int_to_ptr.vmem [resolvable:$true] %s132
          %138 = dma.hbm_to_vmem [thread:$0]  %s131, 1152, %s133, [#allocation7], 128, 128, 8
        $region16: #{tpu_custom_call.1} parent=11 // pred_fallthru
          _
        // Predicated region
        $region17: #{tpu_custom_call.1} parent=11 // pred_check
          %p139 = pneg %p84
        $region18: #{tpu_custom_call.1} parent=11 // pred_check_branch
          %141 = sbr.rel (%p139) target = $region20
        $region19: #{tpu_custom_call.1} parent=11 // pred_region
          _
        $region20: #{tpu_custom_call.1} parent=11 // pred_fallthru
          _
      $region12: #{tpu_custom_call.1} parent=5 // pred_fallthru
        _
      %p142 = scmp.lt.s32.totalorder %s16, 2
      // Predicated region
      $region21: #{tpu_custom_call.1} parent=5 // pred_check
        %p143 = pneg %p142
      $region22: #{tpu_custom_call.1} parent=5 // pred_check_branch
        %145 = sbr.rel (%p143) target = $region24
      $region23: #{tpu_custom_call.1} parent=5 // pred_region
        // Predicated region
        $region25: #{tpu_custom_call.1} parent=23 // pred_check
          %p146 = pneg %p36
        $region26: #{tpu_custom_call.1} parent=23 // pred_check_branch
          %148 = sbr.rel (%p146) target = $region28
        $region27: #{tpu_custom_call.1} parent=23 // pred_region
          %s149 = sand.u32 %s26, 1
          %s150 = scalar_lea.sflag [#allocation4], %s149
          %s151 = sand.u32 %s26, 1
          %s152 = smul.addr %s151, 8
          %s153 = scalar_lea.vmem [#allocation3], %s152
          %155 = vsyncadd %s150, 0
          %s156 = smul.addr %s16, 2
          %s157 = smul.addr %s156, 4
          %s158 = scalar_lea.hbm %s0, %s157
          %s160 = sshll.u32 %s158, 4
          %s161 = int_to_ptr.hbm [resolvable:$true] %s160
          %s162 = sshll.u32 %s153, 4
          %s163 = int_to_ptr.vmem [resolvable:$true] %s162
          %165 = dma.hbm_to_vmem [thread:$0]  %s161, 128, %s163, %s150
        $region28: #{tpu_custom_call.1} parent=23 // pred_fallthru
          _
      $region24: #{tpu_custom_call.1} parent=5 // pred_fallthru
        _
      %p166 = scmp.le.s32.totalorder 1, %s16
      %p167 = scmp.lt.s32.totalorder %s16, 3
      %p168 = pnand %p166, %p167
      %p169 = pneg %p168
      // Predicated region
      $region29: #{tpu_custom_call.1} parent=5 // pred_check
        _
      $region30: #{tpu_custom_call.1} parent=5 // pred_check_branch
        %171 = sbr.rel (%p168) target = $region32
      $region31: #{tpu_custom_call.1} parent=5 // pred_region
        %s172 = ssub.s32 %s16, 1
        %s173 = sand.u32 %s29, 1
        %s174 = scalar_lea.sflag [#allocation4], %s173
        %s175 = sand.u32 %s29, 1
        %s176 = smul.addr %s175, 8
        %s177 = scalar_lea.vmem [#allocation3], %s176
        // Predicated region
        $region33: #{tpu_custom_call.1} parent=31 // pred_check
          %p178 = pneg %p42
        $region34: #{tpu_custom_call.1} parent=31 // pred_check_branch
          %180 = sbr.rel (%p178) target = $region36
        $region35: #{tpu_custom_call.1} parent=31 // pred_region
          %182 = dma.done %s174, 128
        $region36: #{tpu_custom_call.1} parent=31 // pred_fallthru
          _
        // Predicated region
        $region37: #{tpu_custom_call.1} parent=31 // pred_check
          %p183 = pneg %p63
        $region38: #{tpu_custom_call.1} parent=31 // pred_check_branch
          %185 = sbr.rel (%p183) target = $region40
        $region39: #{tpu_custom_call.1} parent=31 // pred_region
          %187 = dma.done [#allocation7], 1152
        $region40: #{tpu_custom_call.1} parent=31 // pred_fallthru
          _
        %s188 = sand.u32 %s29, 1
        %s189 = scalar_lea.sflag [#allocation4], %s188
        %s190 = sand.u32 %s29, 1
        %s191 = smul.addr %s190, 8
        %s192 = scalar_lea.vmem [#allocation3], %s191
        %p193 = pneg %p42
        %p194 = pneg %p39
        %p195 = pneg %p63
        %p196 = pneg %p60
        %p197 = pneg %p84
        %p198 = pneg %p81
        %p199 = pneg %p110
        %p200 = pneg %p107
        %s201 = sand.u32 %s97, 1
        %s202 = scalar_lea.sflag [#allocation5], %s201
        %s203 = sand.u32 %s97, 1
        %s204 = smul.addr %s203, 16
        %s205 = scalar_lea.vmem [#allocation8], %s204
        %206 = vst [vmem:[#allocation2] sm:$0xff] 0.0
        %207 = vst [vmem:[#allocation2 + $0x8] sm:$0xff] 0.0
        %v208 = vld [vmem:[%s177] sm:$0xff]
        %209 = vst [vmem:[#allocation2 + $0x4] sm:$0xff] %v208
        %v210 = vld [vmem:[#allocation2] sm:$0xff]
        %v211 = vld [vmem:[#allocation2 + $0x8] sm:$0xf]
        %v212 = vld [vmem:[#allocation6] sm:$0xff]
        %214 = vrot.lane.b32.xlu0 %v212, 111
        %v215 = vpop.permute.xlu0 %214
        %v216 = vrot.slane %v215, 4
        %vm217 = vcmask 908288
        %v218 = vsel %vm217, %v216, %v215
        %v221 = vmul.f32 %v210, %v218
        %v222 = vmul.f32 %v211, %v216
        %v223 = vadd.f32 %v221, 0.0
        %v224 = vadd.f32 %v222, 0.0
        %s225 = scalar_lea.vmem [#allocation6], 8
        %v226 = vld [vmem:[%s225] sm:$0xff]
        %228 = vrot.lane.b32.xlu0 %v226, 112
        %v229 = vpop.permute.xlu0 %228
        %v230 = vrot.slane %v229, 4
        %vm231 = vcmask 916480
        %v232 = vsel %vm231, %v230, %v229
        %v235 = vmul.f32 %v210, %v232
        %v236 = vmul.f32 %v211, %v230
        %239 = vrot.lane.b32.xlu0 %v235, 127
        %v240 = vpop.permute.xlu0 %239
        %241 = vrot.lane.b32.xlu0 %v236, 127
        %v242 = vpop.permute.xlu0 %241
        %v243 = vrot.slane %v240, 4
        %v244 = vrot.slane %v242, 4
        %vm245 = vcmask 1043456
        %v246 = vsel %vm245, %v243, %v244
        %vm247 = vcmask 1039360
        %v248 = vsel %vm247, %v240, %v246
        %v251 = vadd.f32 %v223, %v248
        %v252 = vadd.f32 %v224, %v242
        %s253 = scalar_lea.vmem [#allocation6], 16
        %v254 = vld [vmem:[%s253] sm:$0xff]
        %256 = vrot.lane.b32.xlu0 %v254, 113
        %v257 = vpop.permute.xlu0 %256
        %v258 = vrot.slane %v257, 4
        %vm259 = vcmask 924672
        %v260 = vsel %vm259, %v258, %v257
        %v263 = vmul.f32 %v210, %v260
        %v264 = vmul.f32 %v211, %v258
        %267 = vrot.lane.b32.xlu0 %v263, 126
        %v268 = vpop.permute.xlu0 %267
        %269 = vrot.lane.b32.xlu0 %v264, 126
        %v270 = vpop.permute.xlu0 %269
        %v271 = vrot.slane %v268, 4
        %v272 = vrot.slane %v270, 4
        %v273 = vsel %vm245, %v271, %v272
        %vm274 = vcmask 1031168
        %v275 = vsel %vm274, %v268, %v273
        %v278 = vadd.f32 %v251, %v275
        %v279 = vadd.f32 %v252, %v270
        %s280 = scalar_lea.vmem [#allocation6], 24
        %v281 = vld [vmem:[%s280] sm:$0xff]
        %283 = vrot.lane.b32.xlu0 %v281, 127
        %v284 = vpop.permute.xlu0 %283
        %v285 = vrot.slane %v284, 4
        %v286 = vsel %vm247, %v285, %v284
        %v289 = vmul.f32 %v210, %v286
        %v290 = vmul.f32 %v211, %v285
        %293 = vrot.lane.b32.xlu0 %v289, 112
        %v294 = vpop.permute.xlu0 %293
        %295 = vrot.lane.b32.xlu0 %v290, 112
        %v296 = vpop.permute.xlu0 %295
        %v297 = vrot.slane %v294, 4
        %v298 = vrot.slane %v296, 4
        %v299 = vsel %vm245, %v297, %v298
        %v300 = vsel %vm231, %v294, %v299
        %v303 = vadd.f32 %v278, %v300
        %v304 = vadd.f32 %v279, %v296
        %v305 = vld [vmem:[#allocation2 + $0x4] sm:$0xff]
        %s306 = scalar_lea.vmem [#allocation6], 32
        %v307 = vld [vmem:[%s306] sm:$0xff]
        %v308 = vmul.f32 %v305, %v307
        %310 = vrot.lane.b32.xlu0 %v308, 111
        %v311 = vpop.permute.xlu0 %310
        %v312 = vrot.slane %v311, 4
        %v313 = vsel %vm217, %v312, %v311
        %v316 = vadd.f32 %v303, %v313
        %v317 = vadd.f32 %v304, %v312
        %v318 = vld [vmem:[#allocation2 + $0x4] sm:$0xff]
        %v319 = vld [vmem:[#allocation2 + $0xc] sm:$0xf]
        %s320 = scalar_lea.vmem [#allocation6], 40
        %v321 = vld [vmem:[%s320] sm:$0xff]
        %323 = vrot.lane.b32.xlu0 %v321, 1
        %v324 = vpop.permute.xlu0 %323
        %v325 = vrot.slane %v324, 4
        %vm326 = vcmask 7168
        %v327 = vsel %vm326, %v325, %v324
        %v330 = vmul.f32 %v318, %v327
        %v331 = vmul.f32 %v319, %v325
        %334 = vrot.lane.b32.xlu0 %v330, 110
        %v335 = vpop.permute.xlu0 %334
        %336 = vrot.lane.b32.xlu0 %v331, 110
        %v337 = vpop.permute.xlu0 %336
        %v338 = vrot.slane %v335, 4
        %vm339 = vcmask 900096
        %v340 = vsel %vm339, %v338, %v335
        %v341 = vsel %vm339, %v338, %v337
        %v344 = vadd.f32 %v316, %v340
        %v345 = vadd.f32 %v317, %v341
        %s346 = scalar_lea.vmem [#allocation6], 48
        %v347 = vld [vmem:[%s346] sm:$0xff]
        %349 = vrot.lane.b32.xlu0 %v347, 15
        %v350 = vpop.permute.xlu0 %349
        %v351 = vrot.slane %v350, 4
        %vm352 = vcmask 121856
        %v353 = vsel %vm352, %v351, %v350
        %v356 = vmul.f32 %v318, %v353
        %v357 = vmul.f32 %v319, %v351
        %360 = vrot.lane.b32.xlu0 %v356, 96
        %v361 = vpop.permute.xlu0 %360
        %362 = vrot.lane.b32.xlu0 %v357, 96
        %v363 = vpop.permute.xlu0 %362
        %v364 = vrot.slane %v361, 4
        %vm365 = vcmask 785408
        %v366 = vsel %vm365, %v364, %v361
        %v367 = vsel %vm365, %v364, %v363
        %v370 = vadd.f32 %v344, %v366
        %v371 = vadd.f32 %v345, %v367
        %s372 = scalar_lea.vmem [#allocation6], 56
        %v373 = vld [vmem:[%s372] sm:$0xff]
        %375 = vrot.lane.b32.xlu0 %v373, 16
        %v376 = vpop.permute.xlu0 %375
        %v377 = vrot.slane %v376, 4
        %vm378 = vcmask 130048
        %v379 = vsel %vm378, %v377, %v376
        %v382 = vmul.f32 %v318, %v379
        %v383 = vmul.f32 %v319, %v377
        %386 = vrot.lane.b32.xlu0 %v382, 95
        %v387 = vpop.permute.xlu0 %386
        %388 = vrot.lane.b32.xlu0 %v383, 95
        %v389 = vpop.permute.xlu0 %388
        %v390 = vrot.slane %v387, 4
        %vm391 = vcmask 777216
        %v392 = vsel %vm391, %v390, %v387
        %v393 = vsel %vm391, %v390, %v389
        %v396 = vadd.f32 %v370, %v392
        %v397 = vadd.f32 %v371, %v393
        %s398 = scalar_lea.vmem [#allocation6], 64
        %v399 = vld [vmem:[%s398] sm:$0xff]
        %401 = vrot.lane.b32.xlu0 %v399, 17
        %v402 = vpop.permute.xlu0 %401
        %v403 = vrot.slane %v402, 4
        %vm404 = vcmask 138240
        %v405 = vsel %vm404, %v403, %v402
        %v408 = vmul.f32 %v318, %v405
        %v409 = vmul.f32 %v319, %v403
        %412 = vrot.lane.b32.xlu0 %v408, 94
        %v413 = vpop.permute.xlu0 %412
        %414 = vrot.lane.b32.xlu0 %v409, 94
        %v415 = vpop.permute.xlu0 %414
        %v416 = vrot.slane %v413, 4
        %vm417 = vcmask 769024
        %v418 = vsel %vm417, %v416, %v413
        %v419 = vsel %vm417, %v416, %v415
        %v422 = vadd.f32 %v396, %v418
        %v423 = vadd.f32 %v397, %v419
        %v424 = vld [vmem:[%s2] sm:$0xff]
        %427 = vst [vmem:[#allocation1] ss:$2 sm:$0xff] %v422
        %s428 = scalar_lea.vmem [#allocation1], 16
        %429 = vst [vmem:[%s428] ss:$2 sm:$0xff] %v423
        %v430 = vld.sshfl [vmem:[#allocation1] sm:$0xff pattern:$0x75316420]
        %v431 = vld.sshfl [vmem:[#allocation1 + $0x8] sm:$0xff pattern:$0x75316420]
        %v432 = vld.sshfl [vmem:[#allocation1 + $0x10] sm:$0xff pattern:$0x75316420]
        %433 = vrot.lane.b32.xlu0 %v430, 17
        %v434 = vpop.permute.xlu0 %433
        %435 = vrot.lane.b32.xlu0 %v431, 17
        %v436 = vpop.permute.xlu0 %435
        %437 = vrot.lane.b32.xlu0 %v432, 17
        %v438 = vpop.permute.xlu0 %437
        %v439 = vsel %vm404, %v434, %v436
        %v440 = vsel %vm404, %v436, %v438
        %vm441 = vcmask 31744
        %v443 = vsel %vm441, %v424, 0
        %v445 = vsel %vm245, %v439, 0
        %v447 = vsel %vm245, %v440, 0
        %449 = vmatpush.msra.mxu0 0.0
        %450 = vmatpush.msra.mxu0 0.0
        %451 = vmatpush.msra.mxu0 0.0
        %452 = vmatpush.msra.mxu0 0.0
        %453 = vmatpush.msra.mxu0 0.0
        %454 = vmatpush.msra.mxu0 0.0
        %455 = vmatpush.msra.mxu0 0.0
        %456 = vmatpush.msra.mxu0 0.0
        %457 = vmatpush.msra.mxu0 0.0
        %458 = vmatpush.msra.mxu0 0.0
        %459 = vmatpush.msra.mxu0 0.0
        %460 = vmatpush.msra.mxu0 0.0
        %461 = vmatpush.msra.mxu0 0.0
        %462 = vmatpush.msra.mxu0 0.0
        %463 = vmatpush.msra.mxu0 0.0
        %464 = vmatpush.msra.mxu0 %v445
        %465 = vmatmul.f32.gmra.mxu0 %v443
        %v466 = vpop.f32.mrf.mxu0
        %v467 = vadd.f32 0.0, %v466
        %468 = vdwg.mxu0
        %469 = vmatpush.msra.mxu0 0.0
        %470 = vmatpush.msra.mxu0 0.0
        %471 = vmatpush.msra.mxu0 0.0
        %472 = vmatpush.msra.mxu0 0.0
        %473 = vmatpush.msra.mxu0 0.0
        %474 = vmatpush.msra.mxu0 0.0
        %475 = vmatpush.msra.mxu0 0.0
        %476 = vmatpush.msra.mxu0 0.0
        %477 = vmatpush.msra.mxu0 0.0
        %478 = vmatpush.msra.mxu0 0.0
        %479 = vmatpush.msra.mxu0 0.0
        %480 = vmatpush.msra.mxu0 0.0
        %481 = vmatpush.msra.mxu0 0.0
        %482 = vmatpush.msra.mxu0 0.0
        %483 = vmatpush.msra.mxu0 0.0
        %484 = vmatpush.msra.mxu0 %v447
        %485 = vmatmul.f32.gmra.mxu0 %v443
        %v486 = vpop.f32.mrf.mxu0
        %v487 = vadd.f32 0.0, %v486
        %488 = vdwg.mxu0
        %489 = vst [vmem:[%s205] sm:$0xff] %v467
        %490 = vst [vmem:[%s205 + $0x8] sm:$0xff] %v487
        %s491 = sand.u32 %s97, 1
        %s492 = scalar_lea.sflag [#allocation5], %s491
        %s493 = sand.u32 %s97, 1
        %s494 = smul.addr %s493, 16
        %s495 = scalar_lea.vmem [#allocation8], %s494
        // Predicated region
        $region41: #{tpu_custom_call.1} parent=31 // pred_check
          %p496 = pneg %p107
        $region42: #{tpu_custom_call.1} parent=31 // pred_check_branch
          %498 = sbr.rel (%p496) target = $region44
        $region43: #{tpu_custom_call.1} parent=31 // pred_region
          %500 = vsyncadd %s492, 0
          %s501 = smul.addr %s21, 2
          %s502 = smul.addr %s501, 8
          %s503 = scalar_lea.hbm %s3, %s502
          %s505 = sshll.u32 %s495, 4
          %s506 = int_to_ptr.vmem [resolvable:$true] %s505
          %s507 = sshll.u32 %s503, 4
          %s508 = int_to_ptr.hbm [resolvable:$true] %s507
          %510 = dma.vmem_to_hbm [thread:$0]  %s506, 256, %s508, %s492
        $region44: #{tpu_custom_call.1} parent=31 // pred_fallthru
          _
      $region32: #{tpu_custom_call.1} parent=5 // pred_fallthru
        _
      %p511 = scmp.le.s32.totalorder 2, %s16
      // Predicated region
      $region45: #{tpu_custom_call.1} parent=5 // pred_check
        %p512 = pneg %p511
      $region46: #{tpu_custom_call.1} parent=5 // pred_check_branch
        %514 = sbr.rel (%p512) target = $region48
      $region47: #{tpu_custom_call.1} parent=5 // pred_region
        %s515 = ssub.s32 %s16, 2
        // Predicated region
        $region49: #{tpu_custom_call.1} parent=47 // pred_check
          %p516 = pneg %p113
        $region50: #{tpu_custom_call.1} parent=47 // pred_check_branch
          %518 = sbr.rel (%p516) target = $region52
        $region51: #{tpu_custom_call.1} parent=47 // pred_region
          %s519 = sand.u32 %s98, 1
          %s520 = scalar_lea.sflag [#allocation5], %s519
          %s521 = sand.u32 %s98, 1
          %s522 = smul.addr %s521, 16
          %s523 = scalar_lea.vmem [#allocation8], %s522
          %525 = dma.done %s520, 256
        $region52: #{tpu_custom_call.1} parent=47 // pred_fallthru
          _
      $region48: #{tpu_custom_call.1} parent=5 // pred_fallthru
        _
    $region6: #{tpu_custom_call.1} parent=1 // loop_footer
      %s20 = sadd.s32 1, %s16
    $region7: #{tpu_custom_call.1} parent=1 // loop_footer_branch
      %15 = sbr.rel target = $region3
    $region8: #{tpu_custom_call.1} parent=1 // loop_exit
      _
    %526 = vsyncpa [#allocation4], 1
    %s527 = scalar_lea.sflag [#allocation4], 1
    %528 = vsyncpa %s527, 1
    %529 = vsyncpa [#allocation7], 1
    %530 = vsyncpa [#allocation5], 1
    %s531 = scalar_lea.sflag [#allocation5], 1
    %532 = vsyncpa %s531, 1

</llo_original>
